<compile_context>
chip_gen: v5e
topology: v5e:2x2
jax: 0.10.0
libtpu: 0.0.40
codegen_flags: <defaults>
</compile_context>

<pallas_src>
import functools

import jax
import jax.numpy as jnp
from jax.experimental import pallas as pl
from jax.experimental.pallas import tpu as pltpu

BN_EPS = 1e-5
NEG_SLOPE = 0.01  # F.leaky_relu default negative slope


def _rup(x, m=128):
    return ((x + m - 1) // m) * m


def _pad_to(a, shape):
    pads = [(0, s - d) for d, s in zip(a.shape, shape)]
    return jnp.pad(a, pads)


def _classify1_kernel(x_ref, *refs):
    """refs = (W0, b0, ..., W4, b4, w5_row, b5_scalar, out).

    x_ref:      (Bt, n)   bf16 activation tile.
    W_i:        (in_p, out_p) bf16 (BatchNorm folded in), resident across the grid.
    b_i:        (1, out_p) f32.
    w5_row:     (1, n_pad) f32 final-layer weight as a row vector.
    b5_scalar:  (1, 1)    f32.
    out:        (1, Bt)   f32 lane-dense sigmoid outputs (one lane per batch row).
    """
    o_ref = refs[-1]
    p = refs[:-1]

    h = x_ref[...]                                     # (Bt, n) bf16
    z = None
    for i in range(5):
        w_ref, b_ref = p[2 * i], p[2 * i + 1]
        # bf16 x bf16 MXU matmul, f32 accumulation; bias + leaky_relu in f32.
        z = jnp.dot(h, w_ref[...], preferred_element_type=jnp.float32) + b_ref[...]
        z = jnp.where(z >= 0.0, z, NEG_SLOPE * z)
        if i < 4:
            h = z.astype(jnp.bfloat16)

    w5_ref, b5_ref = p[10], p[11]
    # Final n->1 layer computed transposed: (1, n_pad) @ (n_pad, Bt) puts the Bt
    # results lane-dense in one row -> tiny HBM writeback, sigmoid on Bt elems only.
    yT = jnp.dot(w5_ref[...], z.T, preferred_element_type=jnp.float32) + b5_ref[...]
    o_ref[...] = jax.nn.sigmoid(yT)                    # (1, Bt) f32


@functools.partial(jax.jit, static_argnames=("batch_tile",))
def classify1_forward(x, params, *, batch_tile=1024):
    """x: [B, n] float32. Returns [B, 1] float32 sigmoid probabilities."""
    B, n = x.shape
    dims = [n, n, 100, 200, 100, n, 1]
    # Padded feature dims for layers 0..5 inputs (x itself stays [B, n] unpadded).
    pdims = [dims[0]] + [_rup(d) for d in dims[1:6]]   # [n, rup(n), 128, 256, 128, rup(n)]

    # ---- batch tile selection ------------------------------------------------
    # Target ~1024-row tiles, but derive Bt from B so padding is bounded and
    # there are >= 2 grid steps whenever B > 128 (v7x megacore split).
    target = max(128, _rup(batch_tile, 128))
    if B <= 128:
        steps, Bt = 1, 128          # cannot split below one 128-lane output row
    else:
        steps = max(pl.cdiv(B, target), 2)
        Bt = _rup(pl.cdiv(B, steps), 128)
    Bp = steps * Bt

    # bf16 input (cast fuses with the batch padding); zero rows are sliced off below.
    x_p = x.astype(jnp.bfloat16)
    if Bp != B:
        x_p = jnp.pad(x_p, ((0, Bp - B), (0, 0)))

    inputs = [x_p]
    in_specs = [pl.BlockSpec((Bt, n), lambda i: (i, 0))]

    wb_bytes = 0
    for i in range(6):
        gamma, beta, mean, var = params["bn"][i]
        scale = gamma / jnp.sqrt(var + BN_EPS)
        shift = beta - mean * scale
        W, b = params["dense"][i]                       # W: [in, out]
        # Fold the eval-mode BatchNorm affine into the dense layer.
        Wf = scale[:, None] * W
        bf = shift @ W + b
        if i < 5:
            Wp = _pad_to(Wf, (pdims[i], pdims[i + 1])).astype(jnp.bfloat16)
            bp = _pad_to(bf.reshape(1, -1), (1, pdims[i + 1])).astype(jnp.float32)
        else:
            # Final n->1 layer as an f32 row vector (used against z.T in-kernel).
            Wp = _pad_to(Wf.T, (1, pdims[5])).astype(jnp.float32)
            bp = bf.reshape(1, 1).astype(jnp.float32)
        inputs += [Wp, bp]
        # Weights/biases: constant block index -> stay resident, no per-tile re-DMA.
        in_specs += [
            pl.BlockSpec(Wp.shape, lambda i: (0, 0)),
            pl.BlockSpec(bp.shape, lambda i: (0, 0)),
        ]
        wb_bytes += Wp.size * Wp.dtype.itemsize + bp.size * 4

    # ---- explicit VMEM budget (raises v5e's 16 MiB default, <= 75% of v7x VMEM) ----
    act_bytes = Bt * max(pdims[1:]) * 4                 # largest f32 intermediate tile
    est = 2 * (Bt * n * 2 + Bt * 4) + 2 * wb_bytes + 6 * act_bytes + (2 << 20)
    vmem_limit = int(min(48 << 20, max(32 << 20, est)))

    out = pl.pallas_call(
        _classify1_kernel,
        out_shape=jax.ShapeDtypeStruct((1, Bp), jnp.float32),
        grid=(steps,),
        in_specs=in_specs,
        out_specs=pl.BlockSpec((1, Bt), lambda i: (0, i)),
        compiler_params=pltpu.CompilerParams(
            dimension_semantics=("parallel",),
            vmem_limit_bytes=vmem_limit,
        ),
    )(*inputs)
    return out[0, :B].reshape(B, 1)


def init_params(key, n):
    """Deterministic synthetic parameters matching Classify1's shapes."""
    dims = [n, n, 100, 200, 100, n, 1]
    dense, bn = [], []
    for i in range(6):
        fin, fout = dims[i], dims[i + 1]
        key, kw, kb, kg, kbe, km, kv = jax.random.split(key, 7)
        bound = 1.0 / jnp.sqrt(jnp.float32(fin))
        # stored as [in, out] (transposed relative to PyTorch nn.Linear)
        W = jax.random.uniform(kw, (fin, fout), jnp.float32, -bound, bound)
        b = jax.random.uniform(kb, (fout,), jnp.float32, -bound, bound)
        dense.append((W, b))
        gamma = jax.random.uniform(kg, (fin,), jnp.float32, 0.5, 1.5)
        beta = jax.random.uniform(kbe, (fin,), jnp.float32, -0.1, 0.1)
        mean = 0.1 * jax.random.normal(km, (fin,), jnp.float32)
        var = jax.random.uniform(kv, (fin,), jnp.float32, 0.5, 1.5)
        bn.append((gamma, beta, mean, var))
    return {"dense": dense, "bn": bn}


def reference_forward(x, params):
    """Pure-JAX f32 reference of the PyTorch forward (eval mode)."""
    h = x
    for i in range(6):
        gamma, beta, mean, var = params["bn"][i]
        h = (h - mean) / jnp.sqrt(var + BN_EPS) * gamma + beta
        W, b = params["dense"][i]
        h = h @ W + b
        if i < 5:
            h = jnp.where(h >= 0.0, h, NEG_SLOPE * h)
    return jax.nn.sigmoid(h)


if __name__ == "__main__":
    key = jax.random.PRNGKey(0)
    kx, kp, kx2 = jax.random.split(key, 3)

    B, n = 16, 32  # n = X_train.shape[1] stand-in
    params = init_params(kp, n)

    # Small batch: single 128-row tile, grid=(1,).
    x = jax.random.normal(kx, (B, n), jnp.float32)
    y = jax.block_until_ready(classify1_forward(x, params))
    y_ref = reference_forward(x, params)
    assert y.shape == (B, 1), y.shape
    # bf16 weights/activations on the MXU vs f32 reference -> loose tolerance.
    assert jnp.allclose(y, y_ref, atol=2.5e-2, rtol=0.0), (
        float(jnp.max(jnp.abs(y - y_ref)))
    )

    # Larger batch: exercises >=2 grid steps (v7x core split) + batch padding.
    B2 = 300
    x2 = jax.random.normal(kx2, (B2, n), jnp.float32)
    y2 = jax.block_until_ready(classify1_forward(x2, params))
    y2_ref = reference_forward(x2, params)
    assert y2.shape == (B2, 1), y2.shape
    assert jnp.allclose(y2, y2_ref, atol=2.5e-2, rtol=0.0), (
        float(jnp.max(jnp.abs(y2 - y2_ref)))
    )

    print("KERNEL_OK")
</pallas_src>

<mosaic_0001>
module attributes {stable_mosaic.version = 11 : i64} {
  func.func @_classify1_kernel(%arg0: i32, %arg1: memref<128x32xbf16, #tpu.memory_space<vmem>>, %arg2: memref<32x128xbf16, #tpu.memory_space<vmem>>, %arg3: memref<1x128xf32, #tpu.memory_space<vmem>>, %arg4: memref<128x128xbf16, #tpu.memory_space<vmem>>, %arg5: memref<1x128xf32, #tpu.memory_space<vmem>>, %arg6: memref<128x256xbf16, #tpu.memory_space<vmem>>, %arg7: memref<1x256xf32, #tpu.memory_space<vmem>>, %arg8: memref<256x128xbf16, #tpu.memory_space<vmem>>, %arg9: memref<1x128xf32, #tpu.memory_space<vmem>>, %arg10: memref<128x128xbf16, #tpu.memory_space<vmem>>, %arg11: memref<1x128xf32, #tpu.memory_space<vmem>>, %arg12: memref<1x128xf32, #tpu.memory_space<vmem>>, %arg13: memref<1x1xf32, #tpu.memory_space<vmem>>, %arg14: memref<1x128xf32, #tpu.memory_space<vmem>>) attributes {dimension_semantics = [#tpu.dimension_semantics<parallel>], iteration_bounds = array<i64: 1>, scalar_prefetch = 0 : i64, scratch_operands = 0 : i64, tpu.core_type = #tpu.core_type<tc>, window_params = [{transform_indices = @transform_0, window_bounds = array<i64: 128, 32>}, {pipeline_mode = #tpu.pipeline_mode<synchronous>, transform_indices = @transform_1, window_bounds = array<i64: 32, 128>}, {pipeline_mode = #tpu.pipeline_mode<synchronous>, transform_indices = @transform_2, window_bounds = array<i64: 1, 128>}, {pipeline_mode = #tpu.pipeline_mode<synchronous>, transform_indices = @transform_3, window_bounds = array<i64: 128, 128>}, {pipeline_mode = #tpu.pipeline_mode<synchronous>, transform_indices = @transform_4, window_bounds = array<i64: 1, 128>}, {pipeline_mode = #tpu.pipeline_mode<synchronous>, transform_indices = @transform_5, window_bounds = array<i64: 128, 256>}, {pipeline_mode = #tpu.pipeline_mode<synchronous>, transform_indices = @transform_6, window_bounds = array<i64: 1, 256>}, {pipeline_mode = #tpu.pipeline_mode<synchronous>, transform_indices = @transform_7, window_bounds = array<i64: 256, 128>}, {pipeline_mode = #tpu.pipeline_mode<synchronous>, transform_indices = @transform_8, window_bounds = array<i64: 1, 128>}, {pipeline_mode = #tpu.pipeline_mode<synchronous>, transform_indices = @transform_9, window_bounds = array<i64: 128, 128>}, {pipeline_mode = #tpu.pipeline_mode<synchronous>, transform_indices = @transform_10, window_bounds = array<i64: 1, 128>}, {pipeline_mode = #tpu.pipeline_mode<synchronous>, transform_indices = @transform_11, window_bounds = array<i64: 1, 128>}, {pipeline_mode = #tpu.pipeline_mode<synchronous>, transform_indices = @transform_12, window_bounds = array<i64: 1, 1>}, {transform_indices = @transform_13, window_bounds = array<i64: 1, 128>}]} {
    %c0 = arith.constant 0 : index
    %c0_0 = arith.constant 0 : index
    %0 = vector.load %arg1[%c0, %c0_0] : memref<128x32xbf16, #tpu.memory_space<vmem>>, vector<128x32xbf16>
    %c0_1 = arith.constant 0 : index
    %c0_2 = arith.constant 0 : index
    %1 = vector.load %arg2[%c0_1, %c0_2] : memref<32x128xbf16, #tpu.memory_space<vmem>>, vector<32x128xbf16>
    %cst = arith.constant dense<0.000000e+00> : vector<128x128xf32>
    %2 = tpu.matmul %0, %1, %cst {dimension_numbers = #tpu.dot_dimension_numbers<[1], [0], [0], [1], [0, 0, 1, 1], [], []>} : vector<128x32xbf16>, vector<32x128xbf16>, vector<128x128xf32> -> vector<128x128xf32>
    %c0_3 = arith.constant 0 : index
    %c0_4 = arith.constant 0 : index
    %3 = vector.load %arg3[%c0_3, %c0_4] : memref<1x128xf32, #tpu.memory_space<vmem>>, vector<1x128xf32>
    %4 = vector.broadcast %3 : vector<1x128xf32> to vector<128x128xf32>
    %5 = arith.addf %2, %4 : vector<128x128xf32>
    %cst_5 = arith.constant 0.000000e+00 : f32
    %6 = vector.broadcast %cst_5 : f32 to vector<128x128xf32>
    %7 = arith.cmpf oge, %5, %6 : vector<128x128xf32>
    %cst_6 = arith.constant 0.00999999977 : f32
    %8 = vector.broadcast %cst_6 : f32 to vector<128x128xf32>
    %9 = arith.mulf %8, %5 : vector<128x128xf32>
    %10 = arith.select %7, %5, %9 : vector<128x128xi1>, vector<128x128xf32>
    %11 = arith.truncf %10 : vector<128x128xf32> to vector<128x128xbf16>
    %c0_7 = arith.constant 0 : index
    %c0_8 = arith.constant 0 : index
    %12 = vector.load %arg4[%c0_7, %c0_8] : memref<128x128xbf16, #tpu.memory_space<vmem>>, vector<128x128xbf16>
    %cst_9 = arith.constant dense<0.000000e+00> : vector<128x128xf32>
    %13 = tpu.matmul %11, %12, %cst_9 {dimension_numbers = #tpu.dot_dimension_numbers<[1], [0], [0], [1], [0, 0, 1, 1], [], []>} : vector<128x128xbf16>, vector<128x128xbf16>, vector<128x128xf32> -> vector<128x128xf32>
    %c0_10 = arith.constant 0 : index
    %c0_11 = arith.constant 0 : index
    %14 = vector.load %arg5[%c0_10, %c0_11] : memref<1x128xf32, #tpu.memory_space<vmem>>, vector<1x128xf32>
    %15 = vector.broadcast %14 : vector<1x128xf32> to vector<128x128xf32>
    %16 = arith.addf %13, %15 : vector<128x128xf32>
    %cst_12 = arith.constant 0.000000e+00 : f32
    %17 = vector.broadcast %cst_12 : f32 to vector<128x128xf32>
    %18 = arith.cmpf oge, %16, %17 : vector<128x128xf32>
    %cst_13 = arith.constant 0.00999999977 : f32
    %19 = vector.broadcast %cst_13 : f32 to vector<128x128xf32>
    %20 = arith.mulf %19, %16 : vector<128x128xf32>
    %21 = arith.select %18, %16, %20 : vector<128x128xi1>, vector<128x128xf32>
    %22 = arith.truncf %21 : vector<128x128xf32> to vector<128x128xbf16>
    %c0_14 = arith.constant 0 : index
    %c0_15 = arith.constant 0 : index
    %23 = vector.load %arg6[%c0_14, %c0_15] : memref<128x256xbf16, #tpu.memory_space<vmem>>, vector<128x256xbf16>
    %cst_16 = arith.constant dense<0.000000e+00> : vector<128x256xf32>
    %24 = tpu.matmul %22, %23, %cst_16 {dimension_numbers = #tpu.dot_dimension_numbers<[1], [0], [0], [1], [0, 0, 1, 1], [], []>} : vector<128x128xbf16>, vector<128x256xbf16>, vector<128x256xf32> -> vector<128x256xf32>
    %c0_17 = arith.constant 0 : index
    %c0_18 = arith.constant 0 : index
    %25 = vector.load %arg7[%c0_17, %c0_18] : memref<1x256xf32, #tpu.memory_space<vmem>>, vector<1x256xf32>
    %26 = vector.broadcast %25 : vector<1x256xf32> to vector<128x256xf32>
    %27 = arith.addf %24, %26 : vector<128x256xf32>
    %cst_19 = arith.constant 0.000000e+00 : f32
    %28 = vector.broadcast %cst_19 : f32 to vector<128x256xf32>
    %29 = arith.cmpf oge, %27, %28 : vector<128x256xf32>
    %cst_20 = arith.constant 0.00999999977 : f32
    %30 = vector.broadcast %cst_20 : f32 to vector<128x256xf32>
    %31 = arith.mulf %30, %27 : vector<128x256xf32>
    %32 = arith.select %29, %27, %31 : vector<128x256xi1>, vector<128x256xf32>
    %33 = arith.truncf %32 : vector<128x256xf32> to vector<128x256xbf16>
    %c0_21 = arith.constant 0 : index
    %c0_22 = arith.constant 0 : index
    %34 = vector.load %arg8[%c0_21, %c0_22] : memref<256x128xbf16, #tpu.memory_space<vmem>>, vector<256x128xbf16>
    %cst_23 = arith.constant dense<0.000000e+00> : vector<128x128xf32>
    %35 = tpu.matmul %33, %34, %cst_23 {dimension_numbers = #tpu.dot_dimension_numbers<[1], [0], [0], [1], [0, 0, 1, 1], [], []>} : vector<128x256xbf16>, vector<256x128xbf16>, vector<128x128xf32> -> vector<128x128xf32>
    %c0_24 = arith.constant 0 : index
    %c0_25 = arith.constant 0 : index
    %36 = vector.load %arg9[%c0_24, %c0_25] : memref<1x128xf32, #tpu.memory_space<vmem>>, vector<1x128xf32>
    %37 = vector.broadcast %36 : vector<1x128xf32> to vector<128x128xf32>
    %38 = arith.addf %35, %37 : vector<128x128xf32>
    %cst_26 = arith.constant 0.000000e+00 : f32
    %39 = vector.broadcast %cst_26 : f32 to vector<128x128xf32>
    %40 = arith.cmpf oge, %38, %39 : vector<128x128xf32>
    %cst_27 = arith.constant 0.00999999977 : f32
    %41 = vector.broadcast %cst_27 : f32 to vector<128x128xf32>
    %42 = arith.mulf %41, %38 : vector<128x128xf32>
    %43 = arith.select %40, %38, %42 : vector<128x128xi1>, vector<128x128xf32>
    %44 = arith.truncf %43 : vector<128x128xf32> to vector<128x128xbf16>
    %c0_28 = arith.constant 0 : index
    %c0_29 = arith.constant 0 : index
    %45 = vector.load %arg10[%c0_28, %c0_29] : memref<128x128xbf16, #tpu.memory_space<vmem>>, vector<128x128xbf16>
    %cst_30 = arith.constant dense<0.000000e+00> : vector<128x128xf32>
    %46 = tpu.matmul %44, %45, %cst_30 {dimension_numbers = #tpu.dot_dimension_numbers<[1], [0], [0], [1], [0, 0, 1, 1], [], []>} : vector<128x128xbf16>, vector<128x128xbf16>, vector<128x128xf32> -> vector<128x128xf32>
    %c0_31 = arith.constant 0 : index
    %c0_32 = arith.constant 0 : index
    %47 = vector.load %arg11[%c0_31, %c0_32] : memref<1x128xf32, #tpu.memory_space<vmem>>, vector<1x128xf32>
    %48 = vector.broadcast %47 : vector<1x128xf32> to vector<128x128xf32>
    %49 = arith.addf %46, %48 : vector<128x128xf32>
    %cst_33 = arith.constant 0.000000e+00 : f32
    %50 = vector.broadcast %cst_33 : f32 to vector<128x128xf32>
    %51 = arith.cmpf oge, %49, %50 : vector<128x128xf32>
    %cst_34 = arith.constant 0.00999999977 : f32
    %52 = vector.broadcast %cst_34 : f32 to vector<128x128xf32>
    %53 = arith.mulf %52, %49 : vector<128x128xf32>
    %54 = arith.select %51, %49, %53 : vector<128x128xi1>, vector<128x128xf32>
    %c0_35 = arith.constant 0 : index
    %c0_36 = arith.constant 0 : index
    %55 = vector.load %arg12[%c0_35, %c0_36] : memref<1x128xf32, #tpu.memory_space<vmem>>, vector<1x128xf32>
    %56 = tpu.transpose %54, [1, 0] : vector<128x128xf32> -> vector<128x128xf32>
    %cst_37 = arith.constant dense<0.000000e+00> : vector<1x128xf32>
    %57 = tpu.matmul %55, %56, %cst_37 {dimension_numbers = #tpu.dot_dimension_numbers<[1], [0], [0], [1], [0, 0, 1, 1], [], []>} : vector<1x128xf32>, vector<128x128xf32>, vector<1x128xf32> -> vector<1x128xf32>
    %c0_38 = arith.constant 0 : index
    %c0_39 = arith.constant 0 : index
    %58 = vector.load %arg13[%c0_38, %c0_39] : memref<1x1xf32, #tpu.memory_space<vmem>>, vector<1x1xf32>
    %59 = vector.broadcast %58 : vector<1x1xf32> to vector<1x128xf32>
    %60 = arith.addf %57, %59 : vector<1x128xf32>
    %61 = arith.negf %60 : vector<1x128xf32>
    %62 = math.exp %61 : vector<1x128xf32>
    %cst_40 = arith.constant 1.000000e+00 : f32
    %63 = vector.broadcast %cst_40 : f32 to vector<1x128xf32>
    %64 = arith.addf %63, %62 : vector<1x128xf32>
    %65 = arith.divf %63, %64 : vector<1x128xf32>
    %c0_41 = arith.constant 0 : index
    %c0_42 = arith.constant 0 : index
    %66 = vector.load %arg14[%c0_41, %c0_42] : memref<1x128xf32, #tpu.memory_space<vmem>>, vector<1x128xf32>
    tpu.vector_store %arg14[%c0_41, %c0_42], %65 {strides = array<i32>} : memref<1x128xf32, #tpu.memory_space<vmem>>, vector<1x128xf32>,
    return
  }
  func.func @transform_0(%arg0: i32) -> (i32, i32) {
    %c0_i32 = arith.constant 0 : i32
    %c0_i32_0 = arith.constant 0 : i32
    return %arg0, %c0_i32 : i32, i32
  }
  func.func @transform_1(%arg0: i32) -> (i32, i32) {
    %c0_i32 = arith.constant 0 : i32
    %c0_i32_0 = arith.constant 0 : i32
    %c0_i32_1 = arith.constant 0 : i32
    return %c0_i32, %c0_i32_0 : i32, i32
  }
  func.func @transform_2(%arg0: i32) -> (i32, i32) {
    %c0_i32 = arith.constant 0 : i32
    %c0_i32_0 = arith.constant 0 : i32
    %c0_i32_1 = arith.constant 0 : i32
    return %c0_i32, %c0_i32_0 : i32, i32
  }
  func.func @transform_3(%arg0: i32) -> (i32, i32) {
    %c0_i32 = arith.constant 0 : i32
    %c0_i32_0 = arith.constant 0 : i32
    %c0_i32_1 = arith.constant 0 : i32
    return %c0_i32, %c0_i32_0 : i32, i32
  }
  func.func @transform_4(%arg0: i32) -> (i32, i32) {
    %c0_i32 = arith.constant 0 : i32
    %c0_i32_0 = arith.constant 0 : i32
    %c0_i32_1 = arith.constant 0 : i32
    return %c0_i32, %c0_i32_0 : i32, i32
  }
  func.func @transform_5(%arg0: i32) -> (i32, i32) {
    %c0_i32 = arith.constant 0 : i32
    %c0_i32_0 = arith.constant 0 : i32
    %c0_i32_1 = arith.constant 0 : i32
    return %c0_i32, %c0_i32_0 : i32, i32
  }
  func.func @transform_6(%arg0: i32) -> (i32, i32) {
    %c0_i32 = arith.constant 0 : i32
    %c0_i32_0 = arith.constant 0 : i32
    %c0_i32_1 = arith.constant 0 : i32
    return %c0_i32, %c0_i32_0 : i32, i32
  }
  func.func @transform_7(%arg0: i32) -> (i32, i32) {
    %c0_i32 = arith.constant 0 : i32
    %c0_i32_0 = arith.constant 0 : i32
    %c0_i32_1 = arith.constant 0 : i32
    return %c0_i32, %c0_i32_0 : i32, i32
  }
  func.func @transform_8(%arg0: i32) -> (i32, i32) {
    %c0_i32 = arith.constant 0 : i32
    %c0_i32_0 = arith.constant 0 : i32
    %c0_i32_1 = arith.constant 0 : i32
    return %c0_i32, %c0_i32_0 : i32, i32
  }
  func.func @transform_9(%arg0: i32) -> (i32, i32) {
    %c0_i32 = arith.constant 0 : i32
    %c0_i32_0 = arith.constant 0 : i32
    %c0_i32_1 = arith.constant 0 : i32
    return %c0_i32, %c0_i32_0 : i32, i32
  }
  func.func @transform_10(%arg0: i32) -> (i32, i32) {
    %c0_i32 = arith.constant 0 : i32
    %c0_i32_0 = arith.constant 0 : i32
    %c0_i32_1 = arith.constant 0 : i32
    return %c0_i32, %c0_i32_0 : i32, i32
  }
  func.func @transform_11(%arg0: i32) -> (i32, i32) {
    %c0_i32 = arith.constant 0 : i32
    %c0_i32_0 = arith.constant 0 : i32
    %c0_i32_1 = arith.constant 0 : i32
    return %c0_i32, %c0_i32_0 : i32, i32
  }
  func.func @transform_12(%arg0: i32) -> (i32, i32) {
    %c0_i32 = arith.constant 0 : i32
    %c0_i32_0 = arith.constant 0 : i32
    %c0_i32_1 = arith.constant 0 : i32
    return %c0_i32, %c0_i32_0 : i32, i32
  }
  func.func @transform_13(%arg0: i32) -> (i32, i32) {
    %c0_i32 = arith.constant 0 : i32
    %c0_i32_0 = arith.constant 0 : i32
    return %c0_i32, %arg0 : i32, i32
  }
}

</mosaic_0001>

<llo_original>
// kernel: classify1_forward.1
$region0: #{classify1_forward.1}
  #allocation0 [shape = 'u32[]', space=smem, size = 0x4, offset = 0x4, fixed_abs, tag = 'smem constant byte address 0x4 - core index']
  #allocation1 [shape = 'u32[72,128]{1,0:T(1,128)}', space=vmem, size = 0x9000, scoped, tag = 'internal scratch']
  #allocation2 [shape = 'f32[1,1]{1,0:T(1,128)S(1)}', space=vmem, size = 0x200, scoped, tag = 'scoped memory for classify1_forward.1']
  %s0 = inlined_call_operand.vmem [shape: bf16[128,32], index: 0, kind: input, shape index: {}]
  %s1 = inlined_call_operand.vmem [shape: bf16[32,128], index: 1, kind: input, shape index: {}]
  %s2 = inlined_call_operand.vmem [shape: f32[1,128], index: 2, kind: input, shape index: {}]
  %s3 = inlined_call_operand.vmem [shape: bf16[128,128], index: 3, kind: input, shape index: {}]
  %s4 = inlined_call_operand.vmem [shape: f32[1,128], index: 4, kind: input, shape index: {}]
  %s5 = inlined_call_operand.vmem [shape: bf16[128,256], index: 5, kind: input, shape index: {}]
  %s6 = inlined_call_operand.vmem [shape: f32[1,256], index: 6, kind: input, shape index: {}]
  %s7 = inlined_call_operand.vmem [shape: bf16[256,128], index: 7, kind: input, shape index: {}]
  %s8 = inlined_call_operand.vmem [shape: f32[1,128], index: 8, kind: input, shape index: {}]
  %s9 = inlined_call_operand.vmem [shape: bf16[128,128], index: 9, kind: input, shape index: {}]
  %s10 = inlined_call_operand.vmem [shape: f32[1,128], index: 10, kind: input, shape index: {}]
  %s11 = inlined_call_operand.vmem [shape: f32[1,128], index: 11, kind: input, shape index: {}]
  %s12 = inlined_call_operand.<no memory space> [shape: f32[1,1], index: 12, kind: input, shape index: {}]
  %s13 = inlined_call_operand.vmem [shape: f32[1,128], index: 13, kind: output, shape index: {}]
  %s14 = sld [smem:[#allocation0]]
  $region62: #{classify1_forward.1} parent=0
    _
  %s16 = ssub.s32 1, %s14
  %s17 = scalar_select 0, %s16, %s14
  %v18 = vstv %s12
  %19 = vst [vmem:[#allocation2] sm:$0x1] %v18
  // Predicated region
  $region2: #{classify1_forward.1} parent=0 // pred_check
    _
  $region3: #{classify1_forward.1} parent=0 // pred_check_branch
    %21 = sbr.rel (0) target = $region5
  $region4: #{classify1_forward.1} parent=0 // pred_region
    _
  $region5: #{classify1_forward.1} parent=0 // pred_fallthru
    _
  // Predicated region
  $region6: #{classify1_forward.1} parent=0 // pred_check
    _
  $region7: #{classify1_forward.1} parent=0 // pred_check_branch
    %23 = sbr.rel (0) target = $region9
  $region8: #{classify1_forward.1} parent=0 // pred_region
    _
  $region9: #{classify1_forward.1} parent=0 // pred_fallthru
    _
  // Predicated region
  $region10: #{classify1_forward.1} parent=0 // pred_check
    _
  $region11: #{classify1_forward.1} parent=0 // pred_check_branch
    %25 = sbr.rel (0) target = $region13
  $region12: #{classify1_forward.1} parent=0 // pred_region
    _
  $region13: #{classify1_forward.1} parent=0 // pred_fallthru
    _
  // Predicated region
  $region14: #{classify1_forward.1} parent=0 // pred_check
    _
  $region15: #{classify1_forward.1} parent=0 // pred_check_branch
    %27 = sbr.rel (0) target = $region17
  $region16: #{classify1_forward.1} parent=0 // pred_region
    _
  $region17: #{classify1_forward.1} parent=0 // pred_fallthru
    _
  // Predicated region
  $region18: #{classify1_forward.1} parent=0 // pred_check
    _
  $region19: #{classify1_forward.1} parent=0 // pred_check_branch
    %29 = sbr.rel (0) target = $region21
  $region20: #{classify1_forward.1} parent=0 // pred_region
    _
  $region21: #{classify1_forward.1} parent=0 // pred_fallthru
    _
  // Predicated region
  $region22: #{classify1_forward.1} parent=0 // pred_check
    _
  $region23: #{classify1_forward.1} parent=0 // pred_check_branch
    %31 = sbr.rel (0) target = $region25
  $region24: #{classify1_forward.1} parent=0 // pred_region
    _
  $region25: #{classify1_forward.1} parent=0 // pred_fallthru
    _
  // Predicated region
  $region26: #{classify1_forward.1} parent=0 // pred_check
    _
  $region27: #{classify1_forward.1} parent=0 // pred_check_branch
    %33 = sbr.rel (0) target = $region29
  $region28: #{classify1_forward.1} parent=0 // pred_region
    _
  $region29: #{classify1_forward.1} parent=0 // pred_fallthru
    _
  // Predicated region
  $region30: #{classify1_forward.1} parent=0 // pred_check
    _
  $region31: #{classify1_forward.1} parent=0 // pred_check_branch
    %35 = sbr.rel (0) target = $region33
  $region32: #{classify1_forward.1} parent=0 // pred_region
    _
  $region33: #{classify1_forward.1} parent=0 // pred_fallthru
    _
  // Predicated region
  $region34: #{classify1_forward.1} parent=0 // pred_check
    _
  $region35: #{classify1_forward.1} parent=0 // pred_check_branch
    %37 = sbr.rel (0) target = $region37
  $region36: #{classify1_forward.1} parent=0 // pred_region
    _
  $region37: #{classify1_forward.1} parent=0 // pred_fallthru
    _
  // Predicated region
  $region38: #{classify1_forward.1} parent=0 // pred_check
    _
  $region39: #{classify1_forward.1} parent=0 // pred_check_branch
    %39 = sbr.rel (0) target = $region41
  $region40: #{classify1_forward.1} parent=0 // pred_region
    _
  $region41: #{classify1_forward.1} parent=0 // pred_fallthru
    _
  // Predicated region
  $region42: #{classify1_forward.1} parent=0 // pred_check
    _
  $region43: #{classify1_forward.1} parent=0 // pred_check_branch
    %41 = sbr.rel (0) target = $region45
  $region44: #{classify1_forward.1} parent=0 // pred_region
    _
  $region45: #{classify1_forward.1} parent=0 // pred_fallthru
    _
  // Predicated region
  $region46: #{classify1_forward.1} parent=0 // pred_check
    _
  $region47: #{classify1_forward.1} parent=0 // pred_check_branch
    %43 = sbr.rel (0) target = $region49
  $region48: #{classify1_forward.1} parent=0 // pred_region
    _
  $region49: #{classify1_forward.1} parent=0 // pred_fallthru
    _
  // Predicated region
  $region50: #{classify1_forward.1} parent=0 // pred_check
    _
  $region51: #{classify1_forward.1} parent=0 // pred_check_branch
    %45 = sbr.rel (0) target = $region53
  $region52: #{classify1_forward.1} parent=0 // pred_region
    _
  $region53: #{classify1_forward.1} parent=0 // pred_fallthru
    _
  %v47 = vld [vmem:[%s0] sm:$0xf]
  %v48 = vld [vmem:[%s0 + $0x4] sm:$0xf]
  %v49 = vld [vmem:[%s0 + $0x8] sm:$0xf]
  %v50 = vld [vmem:[%s0 + $0xc] sm:$0xf]
  %v51 = vld [vmem:[%s0 + $0x10] sm:$0xf]
  %v52 = vld [vmem:[%s0 + $0x14] sm:$0xf]
  %v53 = vld [vmem:[%s0 + $0x18] sm:$0xf]
  %v54 = vld [vmem:[%s0 + $0x1c] sm:$0xf]
  %v55 = vld [vmem:[%s0 + $0x20] sm:$0xf]
  %v56 = vld [vmem:[%s0 + $0x24] sm:$0xf]
  %v57 = vld [vmem:[%s0 + $0x28] sm:$0xf]
  %v58 = vld [vmem:[%s0 + $0x2c] sm:$0xf]
  %v59 = vld [vmem:[%s0 + $0x30] sm:$0xf]
  %v60 = vld [vmem:[%s0 + $0x34] sm:$0xf]
  %v61 = vld [vmem:[%s0 + $0x38] sm:$0xf]
  %v62 = vld [vmem:[%s0 + $0x3c] sm:$0xf]
  %v63 = vld [vmem:[%s1] sm:$0xf]
  %v64 = vld [vmem:[%s1 + $0x4] sm:$0xf]
  %v65 = vld [vmem:[%s1 + $0x8] sm:$0xf]
  %v66 = vld [vmem:[%s1 + $0xc] sm:$0xf]
  %v67 = vld [vmem:[%s2] sm:$0x1]
  %v69 = vperm.slane %v67, 0
  %v87 = vunpack.c.l.b16 %v47
  %v88 = vunpack.c.l.b16 %v48
  %v89 = vunpack.c.l.b16 %v49
  %v90 = vunpack.c.l.b16 %v50
  %v91 = vunpack.c.l.b16 %v51
  %v92 = vunpack.c.l.b16 %v52
  %v93 = vunpack.c.l.b16 %v53
  %v94 = vunpack.c.l.b16 %v54
  %v95 = vunpack.c.l.b16 %v55
  %v96 = vunpack.c.l.b16 %v56
  %v97 = vunpack.c.l.b16 %v57
  %v98 = vunpack.c.l.b16 %v58
  %v99 = vunpack.c.l.b16 %v59
  %v100 = vunpack.c.l.b16 %v60
  %v101 = vunpack.c.l.b16 %v61
  %v102 = vunpack.c.l.b16 %v62
  %v103 = vpack.c.b16 %v88, %v87
  %v104 = vpack.c.b16 %v90, %v89
  %v105 = vpack.c.b16 %v92, %v91
  %v106 = vpack.c.b16 %v94, %v93
  %v107 = vpack.c.b16 %v96, %v95
  %v108 = vpack.c.b16 %v98, %v97
  %v109 = vpack.c.b16 %v100, %v99
  %v110 = vpack.c.b16 %v102, %v101
  %v115 = vunpack.c.l.b16 %v63
  %v116 = vunpack.c.l.b16 %v64
  %v117 = vunpack.c.l.b16 %v65
  %v118 = vunpack.c.l.b16 %v66
  %v119 = vpack.c.b16 %v116, %v115
  %v120 = vpack.c.b16 %v118, %v117
  %vm123 = vcmask 261120
  %v125 = vsel %vm123, %v103, 0
  %v128 = vsel %vm123, %v104, 0
  %v131 = vsel %vm123, %v105, 0
  %v134 = vsel %vm123, %v106, 0
  %v137 = vsel %vm123, %v107, 0
  %v140 = vsel %vm123, %v108, 0
  %v143 = vsel %vm123, %v109, 0
  %v146 = vsel %vm123, %v110, 0
  %148 = vmatpush.bf16.msra.mxu0 0
  %149 = vmatpush.bf16.msra.mxu0 0
  %150 = vmatpush.bf16.msra.mxu0 0
  %151 = vmatpush.bf16.msra.mxu0 0
  %152 = vmatpush.bf16.msra.mxu0 0
  %153 = vmatpush.bf16.msra.mxu0 0
  %154 = vmatpush.bf16.msra.mxu0 %v120
  %155 = vmatpush.bf16.msra.mxu0 %v119
  %156 = vmatmul.bf16.gmra.mxu0 %v125
  %v157 = vpop.f32.mrf.mxu0
  %v158 = vadd.f32 %v69, %v157
  %v159 = vpop.f32.mrf.mxu0
  %v160 = vadd.f32 %v69, %v159
  %161 = vmatmul.bf16.gmra.mxu0 %v128
  %v162 = vpop.f32.mrf.mxu0
  %v163 = vadd.f32 %v69, %v162
  %v164 = vpop.f32.mrf.mxu0
  %v165 = vadd.f32 %v69, %v164
  %166 = vmatmul.bf16.gmra.mxu0 %v131
  %v167 = vpop.f32.mrf.mxu0
  %v168 = vadd.f32 %v69, %v167
  %v169 = vpop.f32.mrf.mxu0
  %v170 = vadd.f32 %v69, %v169
  %171 = vmatmul.bf16.gmra.mxu0 %v134
  %v172 = vpop.f32.mrf.mxu0
  %v173 = vadd.f32 %v69, %v172
  %v174 = vpop.f32.mrf.mxu0
  %v175 = vadd.f32 %v69, %v174
  %176 = vmatmul.bf16.gmra.mxu0 %v137
  %v177 = vpop.f32.mrf.mxu0
  %v178 = vadd.f32 %v69, %v177
  %v179 = vpop.f32.mrf.mxu0
  %v180 = vadd.f32 %v69, %v179
  %181 = vmatmul.bf16.gmra.mxu0 %v140
  %v182 = vpop.f32.mrf.mxu0
  %v183 = vadd.f32 %v69, %v182
  %v184 = vpop.f32.mrf.mxu0
  %v185 = vadd.f32 %v69, %v184
  %186 = vmatmul.bf16.gmra.mxu0 %v143
  %v187 = vpop.f32.mrf.mxu0
  %v188 = vadd.f32 %v69, %v187
  %v189 = vpop.f32.mrf.mxu0
  %v190 = vadd.f32 %v69, %v189
  %191 = vmatmul.bf16.gmra.mxu0 %v146
  %v192 = vpop.f32.mrf.mxu0
  %v193 = vadd.f32 %v69, %v192
  %v194 = vpop.f32.mrf.mxu0
  %v195 = vadd.f32 %v69, %v194
  %196 = vdwg.mxu0
  %vm197 = vcmp.ge.f32.partialorder %v158, 0.0
  %vm198 = vcmp.ge.f32.partialorder %v160, 0.0
  %vm199 = vcmp.ge.f32.partialorder %v163, 0.0
  %vm200 = vcmp.ge.f32.partialorder %v165, 0.0
  %vm201 = vcmp.ge.f32.partialorder %v168, 0.0
  %vm202 = vcmp.ge.f32.partialorder %v170, 0.0
  %vm203 = vcmp.ge.f32.partialorder %v173, 0.0
  %vm204 = vcmp.ge.f32.partialorder %v175, 0.0
  %vm205 = vcmp.ge.f32.partialorder %v178, 0.0
  %vm206 = vcmp.ge.f32.partialorder %v180, 0.0
  %vm207 = vcmp.ge.f32.partialorder %v183, 0.0
  %vm208 = vcmp.ge.f32.partialorder %v185, 0.0
  %vm209 = vcmp.ge.f32.partialorder %v188, 0.0
  %vm210 = vcmp.ge.f32.partialorder %v190, 0.0
  %vm211 = vcmp.ge.f32.partialorder %v193, 0.0
  %vm212 = vcmp.ge.f32.partialorder %v195, 0.0
  %v213 = vmul.f32 %v158, 0.01
  %v214 = vmul.f32 %v160, 0.01
  %v215 = vmul.f32 %v163, 0.01
  %v216 = vmul.f32 %v165, 0.01
  %v217 = vmul.f32 %v168, 0.01
  %v218 = vmul.f32 %v170, 0.01
  %v219 = vmul.f32 %v173, 0.01
  %v220 = vmul.f32 %v175, 0.01
  %v221 = vmul.f32 %v178, 0.01
  %v222 = vmul.f32 %v180, 0.01
  %v223 = vmul.f32 %v183, 0.01
  %v224 = vmul.f32 %v185, 0.01
  %v225 = vmul.f32 %v188, 0.01
  %v226 = vmul.f32 %v190, 0.01
  %v227 = vmul.f32 %v193, 0.01
  %v228 = vmul.f32 %v195, 0.01
  %v229 = vsel %vm197, %v158, %v213
  %v230 = vsel %vm198, %v160, %v214
  %v231 = vsel %vm199, %v163, %v215
  %v232 = vsel %vm200, %v165, %v216
  %v233 = vsel %vm201, %v168, %v217
  %v234 = vsel %vm202, %v170, %v218
  %v235 = vsel %vm203, %v173, %v219
  %v236 = vsel %vm204, %v175, %v220
  %v237 = vsel %vm205, %v178, %v221
  %v238 = vsel %vm206, %v180, %v222
  %v239 = vsel %vm207, %v183, %v223
  %v240 = vsel %vm208, %v185, %v224
  %v241 = vsel %vm209, %v188, %v225
  %v242 = vsel %vm210, %v190, %v226
  %v243 = vsel %vm211, %v193, %v227
  %v244 = vsel %vm212, %v195, %v228
  %v245 = vpack.c.bf16 %v230, %v229
  %v246 = vpack.c.bf16 %v232, %v231
  %v247 = vpack.c.bf16 %v234, %v233
  %v248 = vpack.c.bf16 %v236, %v235
  %v249 = vpack.c.bf16 %v238, %v237
  %v250 = vpack.c.bf16 %v240, %v239
  %v251 = vpack.c.bf16 %v242, %v241
  %v252 = vpack.c.bf16 %v244, %v243
  %v253 = vld [vmem:[%s3] sm:$0xf]
  %v254 = vld [vmem:[%s3 + $0x4] sm:$0xf]
  %v255 = vld [vmem:[%s3 + $0x8] sm:$0xf]
  %v256 = vld [vmem:[%s3 + $0xc] sm:$0xf]
  %v257 = vld [vmem:[%s3 + $0x10] sm:$0xf]
  %v258 = vld [vmem:[%s3 + $0x14] sm:$0xf]
  %v259 = vld [vmem:[%s3 + $0x18] sm:$0xf]
  %v260 = vld [vmem:[%s3 + $0x1c] sm:$0xf]
  %v261 = vld [vmem:[%s3 + $0x20] sm:$0xf]
  %v262 = vld [vmem:[%s3 + $0x24] sm:$0xf]
  %v263 = vld [vmem:[%s3 + $0x28] sm:$0xf]
  %v264 = vld [vmem:[%s3 + $0x2c] sm:$0xf]
  %v265 = vld [vmem:[%s3 + $0x30] sm:$0xf]
  %v266 = vld [vmem:[%s3 + $0x34] sm:$0xf]
  %v267 = vld [vmem:[%s3 + $0x38] sm:$0xf]
  %v268 = vld [vmem:[%s3 + $0x3c] sm:$0xf]
  %v269 = vld [vmem:[%s4] sm:$0x1]
  %v271 = vperm.slane %v269, 0
  %v289 = vunpack.c.l.b16 %v253
  %v290 = vunpack.c.l.b16 %v254
  %v291 = vunpack.c.l.b16 %v255
  %v292 = vunpack.c.l.b16 %v256
  %v293 = vunpack.c.l.b16 %v257
  %v294 = vunpack.c.l.b16 %v258
  %v295 = vunpack.c.l.b16 %v259
  %v296 = vunpack.c.l.b16 %v260
  %v297 = vunpack.c.l.b16 %v261
  %v298 = vunpack.c.l.b16 %v262
  %v299 = vunpack.c.l.b16 %v263
  %v300 = vunpack.c.l.b16 %v264
  %v301 = vunpack.c.l.b16 %v265
  %v302 = vunpack.c.l.b16 %v266
  %v303 = vunpack.c.l.b16 %v267
  %v304 = vunpack.c.l.b16 %v268
  %v305 = vpack.c.b16 %v290, %v289
  %v306 = vpack.c.b16 %v292, %v291
  %v307 = vpack.c.b16 %v294, %v293
  %v308 = vpack.c.b16 %v296, %v295
  %v309 = vpack.c.b16 %v298, %v297
  %v310 = vpack.c.b16 %v300, %v299
  %v311 = vpack.c.b16 %v302, %v301
  %v312 = vpack.c.b16 %v304, %v303
  %321 = vmatpush.bf16.msra.mxu0 %v312
  %322 = vmatpush.bf16.msra.mxu0 %v311
  %323 = vmatpush.bf16.msra.mxu0 %v310
  %324 = vmatpush.bf16.msra.mxu0 %v309
  %325 = vmatpush.bf16.msra.mxu0 %v308
  %326 = vmatpush.bf16.msra.mxu0 %v307
  %327 = vmatpush.bf16.msra.mxu0 %v306
  %328 = vmatpush.bf16.msra.mxu0 %v305
  %329 = vmatmul.bf16.gmra.mxu0 %v245
  %v330 = vpop.f32.mrf.mxu0
  %v331 = vadd.f32 %v271, %v330
  %v332 = vpop.f32.mrf.mxu0
  %v333 = vadd.f32 %v271, %v332
  %334 = vmatmul.bf16.gmra.mxu0 %v246
  %v335 = vpop.f32.mrf.mxu0
  %v336 = vadd.f32 %v271, %v335
  %v337 = vpop.f32.mrf.mxu0
  %v338 = vadd.f32 %v271, %v337
  %339 = vmatmul.bf16.gmra.mxu0 %v247
  %v340 = vpop.f32.mrf.mxu0
  %v341 = vadd.f32 %v271, %v340
  %v342 = vpop.f32.mrf.mxu0
  %v343 = vadd.f32 %v271, %v342
  %344 = vmatmul.bf16.gmra.mxu0 %v248
  %v345 = vpop.f32.mrf.mxu0
  %v346 = vadd.f32 %v271, %v345
  %v347 = vpop.f32.mrf.mxu0
  %v348 = vadd.f32 %v271, %v347
  %349 = vmatmul.bf16.gmra.mxu0 %v249
  %v350 = vpop.f32.mrf.mxu0
  %v351 = vadd.f32 %v271, %v350
  %v352 = vpop.f32.mrf.mxu0
  %v353 = vadd.f32 %v271, %v352
  %354 = vmatmul.bf16.gmra.mxu0 %v250
  %v355 = vpop.f32.mrf.mxu0
  %v356 = vadd.f32 %v271, %v355
  %v357 = vpop.f32.mrf.mxu0
  %v358 = vadd.f32 %v271, %v357
  %359 = vmatmul.bf16.gmra.mxu0 %v251
  %v360 = vpop.f32.mrf.mxu0
  %v361 = vadd.f32 %v271, %v360
  %v362 = vpop.f32.mrf.mxu0
  %v363 = vadd.f32 %v271, %v362
  %364 = vmatmul.bf16.gmra.mxu0 %v252
  %v365 = vpop.f32.mrf.mxu0
  %v366 = vadd.f32 %v271, %v365
  %v367 = vpop.f32.mrf.mxu0
  %v368 = vadd.f32 %v271, %v367
  %369 = vdwg.mxu0
  %vm370 = vcmp.ge.f32.partialorder %v331, 0.0
  %vm371 = vcmp.ge.f32.partialorder %v333, 0.0
  %vm372 = vcmp.ge.f32.partialorder %v336, 0.0
  %vm373 = vcmp.ge.f32.partialorder %v338, 0.0
  %vm374 = vcmp.ge.f32.partialorder %v341, 0.0
  %vm375 = vcmp.ge.f32.partialorder %v343, 0.0
  %vm376 = vcmp.ge.f32.partialorder %v346, 0.0
  %vm377 = vcmp.ge.f32.partialorder %v348, 0.0
  %vm378 = vcmp.ge.f32.partialorder %v351, 0.0
  %vm379 = vcmp.ge.f32.partialorder %v353, 0.0
  %vm380 = vcmp.ge.f32.partialorder %v356, 0.0
  %vm381 = vcmp.ge.f32.partialorder %v358, 0.0
  %vm382 = vcmp.ge.f32.partialorder %v361, 0.0
  %vm383 = vcmp.ge.f32.partialorder %v363, 0.0
  %vm384 = vcmp.ge.f32.partialorder %v366, 0.0
  %vm385 = vcmp.ge.f32.partialorder %v368, 0.0
  %v386 = vmul.f32 %v331, 0.01
  %v387 = vmul.f32 %v333, 0.01
  %v388 = vmul.f32 %v336, 0.01
  %v389 = vmul.f32 %v338, 0.01
  %v390 = vmul.f32 %v341, 0.01
  %v391 = vmul.f32 %v343, 0.01
  %v392 = vmul.f32 %v346, 0.01
  %v393 = vmul.f32 %v348, 0.01
  %v394 = vmul.f32 %v351, 0.01
  %v395 = vmul.f32 %v353, 0.01
  %v396 = vmul.f32 %v356, 0.01
  %v397 = vmul.f32 %v358, 0.01
  %v398 = vmul.f32 %v361, 0.01
  %v399 = vmul.f32 %v363, 0.01
  %v400 = vmul.f32 %v366, 0.01
  %v401 = vmul.f32 %v368, 0.01
  %v402 = vsel %vm370, %v331, %v386
  %v403 = vsel %vm371, %v333, %v387
  %v404 = vsel %vm372, %v336, %v388
  %v405 = vsel %vm373, %v338, %v389
  %v406 = vsel %vm374, %v341, %v390
  %v407 = vsel %vm375, %v343, %v391
  %v408 = vsel %vm376, %v346, %v392
  %v409 = vsel %vm377, %v348, %v393
  %v410 = vsel %vm378, %v351, %v394
  %v411 = vsel %vm379, %v353, %v395
  %v412 = vsel %vm380, %v356, %v396
  %v413 = vsel %vm381, %v358, %v397
  %v414 = vsel %vm382, %v361, %v398
  %v415 = vsel %vm383, %v363, %v399
  %v416 = vsel %vm384, %v366, %v400
  %v417 = vsel %vm385, %v368, %v401
  %v418 = vpack.c.bf16 %v403, %v402
  %v419 = vpack.c.bf16 %v405, %v404
  %v420 = vpack.c.bf16 %v407, %v406
  %v421 = vpack.c.bf16 %v409, %v408
  %v422 = vpack.c.bf16 %v411, %v410
  %v423 = vpack.c.bf16 %v413, %v412
  %v424 = vpack.c.bf16 %v415, %v414
  %v425 = vpack.c.bf16 %v417, %v416
  %v426 = vld [vmem:[%s5] sm:$0xff]
  %v427 = vld [vmem:[%s5 + $0x8] sm:$0xff]
  %v428 = vld [vmem:[%s5 + $0x10] sm:$0xff]
  %v429 = vld [vmem:[%s5 + $0x18] sm:$0xff]
  %v430 = vld [vmem:[%s5 + $0x20] sm:$0xff]
  %v431 = vld [vmem:[%s5 + $0x28] sm:$0xff]
  %v432 = vld [vmem:[%s5 + $0x30] sm:$0xff]
  %v433 = vld [vmem:[%s5 + $0x38] sm:$0xff]
  %v434 = vld [vmem:[%s5 + $0x40] sm:$0xff]
  %v435 = vld [vmem:[%s5 + $0x48] sm:$0xff]
  %v436 = vld [vmem:[%s5 + $0x50] sm:$0xff]
  %v437 = vld [vmem:[%s5 + $0x58] sm:$0xff]
  %v438 = vld [vmem:[%s5 + $0x60] sm:$0xff]
  %v439 = vld [vmem:[%s5 + $0x68] sm:$0xff]
  %v440 = vld [vmem:[%s5 + $0x70] sm:$0xff]
  %v441 = vld [vmem:[%s5 + $0x78] sm:$0xff]
  %v442 = vld [vmem:[%s6] sm:$0x3]
  %v444 = vperm.slane %v442, 0
  %v445 = vperm.slane %v442, 1
  %v464 = vunpack.c.l.b16 %v426
  %v465 = vunpack.c.h.b16 %v426
  %v466 = vunpack.c.l.b16 %v427
  %v467 = vunpack.c.h.b16 %v427
  %v468 = vunpack.c.l.b16 %v428
  %v469 = vunpack.c.h.b16 %v428
  %v470 = vunpack.c.l.b16 %v429
  %v471 = vunpack.c.h.b16 %v429
  %v472 = vunpack.c.l.b16 %v430
  %v473 = vunpack.c.h.b16 %v430
  %v474 = vunpack.c.l.b16 %v431
  %v475 = vunpack.c.h.b16 %v431
  %v476 = vunpack.c.l.b16 %v432
  %v477 = vunpack.c.h.b16 %v432
  %v478 = vunpack.c.l.b16 %v433
  %v479 = vunpack.c.h.b16 %v433
  %v480 = vunpack.c.l.b16 %v434
  %v481 = vunpack.c.h.b16 %v434
  %v482 = vunpack.c.l.b16 %v435
  %v483 = vunpack.c.h.b16 %v435
  %v484 = vunpack.c.l.b16 %v436
  %v485 = vunpack.c.h.b16 %v436
  %v486 = vunpack.c.l.b16 %v437
  %v487 = vunpack.c.h.b16 %v437
  %v488 = vunpack.c.l.b16 %v438
  %v489 = vunpack.c.h.b16 %v438
  %v490 = vunpack.c.l.b16 %v439
  %v491 = vunpack.c.h.b16 %v439
  %v492 = vunpack.c.l.b16 %v440
  %v493 = vunpack.c.h.b16 %v440
  %v494 = vunpack.c.l.b16 %v441
  %v495 = vunpack.c.h.b16 %v441
  %v496 = vpack.c.b16 %v466, %v464
  %v497 = vpack.c.b16 %v467, %v465
  %v498 = vpack.c.b16 %v470, %v468
  %v499 = vpack.c.b16 %v471, %v469
  %v500 = vpack.c.b16 %v474, %v472
  %v501 = vpack.c.b16 %v475, %v473
  %v502 = vpack.c.b16 %v478, %v476
  %v503 = vpack.c.b16 %v479, %v477
  %v504 = vpack.c.b16 %v482, %v480
  %v505 = vpack.c.b16 %v483, %v481
  %v506 = vpack.c.b16 %v486, %v484
  %v507 = vpack.c.b16 %v487, %v485
  %v508 = vpack.c.b16 %v490, %v488
  %v509 = vpack.c.b16 %v491, %v489
  %v510 = vpack.c.b16 %v494, %v492
  %v511 = vpack.c.b16 %v495, %v493
  %528 = vmatpush.bf16.msra.mxu0 %v510
  %529 = vmatpush.bf16.msra.mxu0 %v508
  %530 = vmatpush.bf16.msra.mxu0 %v506
  %531 = vmatpush.bf16.msra.mxu0 %v504
  %532 = vmatpush.bf16.msra.mxu0 %v502
  %533 = vmatpush.bf16.msra.mxu0 %v500
  %534 = vmatpush.bf16.msra.mxu0 %v498
  %535 = vmatpush.bf16.msra.mxu0 %v496
  %536 = vmatmul.bf16.gmra.mxu0 %v418
  %v537 = vpop.f32.mrf.mxu0
  %v538 = vadd.f32 %v444, %v537
  %v539 = vpop.f32.mrf.mxu0
  %v540 = vadd.f32 %v444, %v539
  %541 = vmatmul.bf16.gmra.mxu0 %v419
  %v542 = vpop.f32.mrf.mxu0
  %v543 = vadd.f32 %v444, %v542
  %v544 = vpop.f32.mrf.mxu0
  %v545 = vadd.f32 %v444, %v544
  %546 = vmatmul.bf16.gmra.mxu0 %v420
  %v547 = vpop.f32.mrf.mxu0
  %v548 = vadd.f32 %v444, %v547
  %v549 = vpop.f32.mrf.mxu0
  %v550 = vadd.f32 %v444, %v549
  %551 = vmatmul.bf16.gmra.mxu0 %v421
  %v552 = vpop.f32.mrf.mxu0
  %v553 = vadd.f32 %v444, %v552
  %v554 = vpop.f32.mrf.mxu0
  %v555 = vadd.f32 %v444, %v554
  %556 = vmatmul.bf16.gmra.mxu0 %v422
  %v557 = vpop.f32.mrf.mxu0
  %v558 = vadd.f32 %v444, %v557
  %v559 = vpop.f32.mrf.mxu0
  %v560 = vadd.f32 %v444, %v559
  %561 = vmatmul.bf16.gmra.mxu0 %v423
  %v562 = vpop.f32.mrf.mxu0
  %v563 = vadd.f32 %v444, %v562
  %v564 = vpop.f32.mrf.mxu0
  %v565 = vadd.f32 %v444, %v564
  %566 = vmatmul.bf16.gmra.mxu0 %v424
  %v567 = vpop.f32.mrf.mxu0
  %v568 = vadd.f32 %v444, %v567
  %v569 = vpop.f32.mrf.mxu0
  %v570 = vadd.f32 %v444, %v569
  %571 = vmatmul.bf16.gmra.mxu0 %v425
  %v572 = vpop.f32.mrf.mxu0
  %v573 = vadd.f32 %v444, %v572
  %v574 = vpop.f32.mrf.mxu0
  %v575 = vadd.f32 %v444, %v574
  %576 = vdwg.mxu0
  %577 = vmatpush.bf16.msra.mxu0 %v511
  %578 = vmatpush.bf16.msra.mxu0 %v509
  %579 = vmatpush.bf16.msra.mxu0 %v507
  %580 = vmatpush.bf16.msra.mxu0 %v505
  %581 = vmatpush.bf16.msra.mxu0 %v503
  %582 = vmatpush.bf16.msra.mxu0 %v501
  %583 = vmatpush.bf16.msra.mxu0 %v499
  %584 = vmatpush.bf16.msra.mxu0 %v497
  %585 = vmatmul.bf16.gmra.mxu0 %v418
  %v586 = vpop.f32.mrf.mxu0
  %v587 = vadd.f32 %v445, %v586
  %v588 = vpop.f32.mrf.mxu0
  %v589 = vadd.f32 %v445, %v588
  %590 = vmatmul.bf16.gmra.mxu0 %v419
  %v591 = vpop.f32.mrf.mxu0
  %v592 = vadd.f32 %v445, %v591
  %v593 = vpop.f32.mrf.mxu0
  %v594 = vadd.f32 %v445, %v593
  %595 = vmatmul.bf16.gmra.mxu0 %v420
  %v596 = vpop.f32.mrf.mxu0
  %v597 = vadd.f32 %v445, %v596
  %v598 = vpop.f32.mrf.mxu0
  %v599 = vadd.f32 %v445, %v598
  %600 = vmatmul.bf16.gmra.mxu0 %v421
  %v601 = vpop.f32.mrf.mxu0
  %v602 = vadd.f32 %v445, %v601
  %v603 = vpop.f32.mrf.mxu0
  %v604 = vadd.f32 %v445, %v603
  %605 = vmatmul.bf16.gmra.mxu0 %v422
  %v606 = vpop.f32.mrf.mxu0
  %v607 = vadd.f32 %v445, %v606
  %v608 = vpop.f32.mrf.mxu0
  %v609 = vadd.f32 %v445, %v608
  %610 = vmatmul.bf16.gmra.mxu0 %v423
  %v611 = vpop.f32.mrf.mxu0
  %v612 = vadd.f32 %v445, %v611
  %v613 = vpop.f32.mrf.mxu0
  %v614 = vadd.f32 %v445, %v613
  %615 = vmatmul.bf16.gmra.mxu0 %v424
  %v616 = vpop.f32.mrf.mxu0
  %v617 = vadd.f32 %v445, %v616
  %v618 = vpop.f32.mrf.mxu0
  %v619 = vadd.f32 %v445, %v618
  %620 = vmatmul.bf16.gmra.mxu0 %v425
  %v621 = vpop.f32.mrf.mxu0
  %v622 = vadd.f32 %v445, %v621
  %v623 = vpop.f32.mrf.mxu0
  %v624 = vadd.f32 %v445, %v623
  %625 = vdwg.mxu0
  %vm626 = vcmp.ge.f32.partialorder %v538, 0.0
  %vm627 = vcmp.ge.f32.partialorder %v587, 0.0
  %vm628 = vcmp.ge.f32.partialorder %v540, 0.0
  %vm629 = vcmp.ge.f32.partialorder %v589, 0.0
  %vm630 = vcmp.ge.f32.partialorder %v543, 0.0
  %vm631 = vcmp.ge.f32.partialorder %v592, 0.0
  %vm632 = vcmp.ge.f32.partialorder %v545, 0.0
  %vm633 = vcmp.ge.f32.partialorder %v594, 0.0
  %vm634 = vcmp.ge.f32.partialorder %v548, 0.0
  %vm635 = vcmp.ge.f32.partialorder %v597, 0.0
  %vm636 = vcmp.ge.f32.partialorder %v550, 0.0
  %vm637 = vcmp.ge.f32.partialorder %v599, 0.0
  %vm638 = vcmp.ge.f32.partialorder %v553, 0.0
  %vm639 = vcmp.ge.f32.partialorder %v602, 0.0
  %vm640 = vcmp.ge.f32.partialorder %v555, 0.0
  %vm641 = vcmp.ge.f32.partialorder %v604, 0.0
  %vm642 = vcmp.ge.f32.partialorder %v558, 0.0
  %vm643 = vcmp.ge.f32.partialorder %v607, 0.0
  %vm644 = vcmp.ge.f32.partialorder %v560, 0.0
  %vm645 = vcmp.ge.f32.partialorder %v609, 0.0
  %vm646 = vcmp.ge.f32.partialorder %v563, 0.0
  %vm647 = vcmp.ge.f32.partialorder %v612, 0.0
  %vm648 = vcmp.ge.f32.partialorder %v565, 0.0
  %vm649 = vcmp.ge.f32.partialorder %v614, 0.0
  %vm650 = vcmp.ge.f32.partialorder %v568, 0.0
  %vm651 = vcmp.ge.f32.partialorder %v617, 0.0
  %vm652 = vcmp.ge.f32.partialorder %v570, 0.0
  %vm653 = vcmp.ge.f32.partialorder %v619, 0.0
  %vm654 = vcmp.ge.f32.partialorder %v573, 0.0
  %vm655 = vcmp.ge.f32.partialorder %v622, 0.0
  %vm656 = vcmp.ge.f32.partialorder %v575, 0.0
  %vm657 = vcmp.ge.f32.partialorder %v624, 0.0
  %v658 = vmul.f32 %v538, 0.01
  %v659 = vmul.f32 %v587, 0.01
  %v660 = vmul.f32 %v540, 0.01
  %v661 = vmul.f32 %v589, 0.01
  %v662 = vmul.f32 %v543, 0.01
  %v663 = vmul.f32 %v592, 0.01
  %v664 = vmul.f32 %v545, 0.01
  %v665 = vmul.f32 %v594, 0.01
  %v666 = vmul.f32 %v548, 0.01
  %v667 = vmul.f32 %v597, 0.01
  %v668 = vmul.f32 %v550, 0.01
  %v669 = vmul.f32 %v599, 0.01
  %v670 = vmul.f32 %v553, 0.01
  %v671 = vmul.f32 %v602, 0.01
  %v672 = vmul.f32 %v555, 0.01
  %v673 = vmul.f32 %v604, 0.01
  %v674 = vmul.f32 %v558, 0.01
  %v675 = vmul.f32 %v607, 0.01
  %v676 = vmul.f32 %v560, 0.01
  %v677 = vmul.f32 %v609, 0.01
  %v678 = vmul.f32 %v563, 0.01
  %v679 = vmul.f32 %v612, 0.01
  %v680 = vmul.f32 %v565, 0.01
  %v681 = vmul.f32 %v614, 0.01
  %v682 = vmul.f32 %v568, 0.01
  %v683 = vmul.f32 %v617, 0.01
  %v684 = vmul.f32 %v570, 0.01
  %v685 = vmul.f32 %v619, 0.01
  %v686 = vmul.f32 %v573, 0.01
  %v687 = vmul.f32 %v622, 0.01
  %v688 = vmul.f32 %v575, 0.01
  %v689 = vmul.f32 %v624, 0.01
  %v690 = vsel %vm626, %v538, %v658
  %v691 = vsel %vm627, %v587, %v659
  %v692 = vsel %vm628, %v540, %v660
  %v693 = vsel %vm629, %v589, %v661
  %v694 = vsel %vm630, %v543, %v662
  %v695 = vsel %vm631, %v592, %v663
  %v696 = vsel %vm632, %v545, %v664
  %v697 = vsel %vm633, %v594, %v665
  %v698 = vsel %vm634, %v548, %v666
  %v699 = vsel %vm635, %v597, %v667
  %v700 = vsel %vm636, %v550, %v668
  %v701 = vsel %vm637, %v599, %v669
  %v702 = vsel %vm638, %v553, %v670
  %v703 = vsel %vm639, %v602, %v671
  %v704 = vsel %vm640, %v555, %v672
  %v705 = vsel %vm641, %v604, %v673
  %v706 = vsel %vm642, %v558, %v674
  %v707 = vsel %vm643, %v607, %v675
  %v708 = vsel %vm644, %v560, %v676
  %v709 = vsel %vm645, %v609, %v677
  %v710 = vsel %vm646, %v563, %v678
  %v711 = vsel %vm647, %v612, %v679
  %v712 = vsel %vm648, %v565, %v680
  %v713 = vsel %vm649, %v614, %v681
  %v714 = vsel %vm650, %v568, %v682
  %v715 = vsel %vm651, %v617, %v683
  %v716 = vsel %vm652, %v570, %v684
  %v717 = vsel %vm653, %v619, %v685
  %v718 = vsel %vm654, %v573, %v686
  %v719 = vsel %vm655, %v622, %v687
  %v720 = vsel %vm656, %v575, %v688
  %v721 = vsel %vm657, %v624, %v689
  %v722 = vpack.c.bf16 %v692, %v690
  %v723 = vpack.c.bf16 %v693, %v691
  %v724 = vpack.c.bf16 %v696, %v694
  %v725 = vpack.c.bf16 %v697, %v695
  %v726 = vpack.c.bf16 %v700, %v698
  %v727 = vpack.c.bf16 %v701, %v699
  %v728 = vpack.c.bf16 %v704, %v702
  %v729 = vpack.c.bf16 %v705, %v703
  %v730 = vpack.c.bf16 %v708, %v706
  %v731 = vpack.c.bf16 %v709, %v707
  %v732 = vpack.c.bf16 %v712, %v710
  %v733 = vpack.c.bf16 %v713, %v711
  %v734 = vpack.c.bf16 %v716, %v714
  %v735 = vpack.c.bf16 %v717, %v715
  %v736 = vpack.c.bf16 %v720, %v718
  %v737 = vpack.c.bf16 %v721, %v719
  %v738 = vld [vmem:[%s7] sm:$0xf]
  %v739 = vld [vmem:[%s7 + $0x4] sm:$0xf]
  %v740 = vld [vmem:[%s7 + $0x8] sm:$0xf]
  %v741 = vld [vmem:[%s7 + $0xc] sm:$0xf]
  %v742 = vld [vmem:[%s7 + $0x10] sm:$0xf]
  %v743 = vld [vmem:[%s7 + $0x14] sm:$0xf]
  %v744 = vld [vmem:[%s7 + $0x18] sm:$0xf]
  %v745 = vld [vmem:[%s7 + $0x1c] sm:$0xf]
  %v746 = vld [vmem:[%s7 + $0x20] sm:$0xf]
  %v747 = vld [vmem:[%s7 + $0x24] sm:$0xf]
  %v748 = vld [vmem:[%s7 + $0x28] sm:$0xf]
  %v749 = vld [vmem:[%s7 + $0x2c] sm:$0xf]
  %v750 = vld [vmem:[%s7 + $0x30] sm:$0xf]
  %v751 = vld [vmem:[%s7 + $0x34] sm:$0xf]
  %v752 = vld [vmem:[%s7 + $0x38] sm:$0xf]
  %v753 = vld [vmem:[%s7 + $0x3c] sm:$0xf]
  %v754 = vld [vmem:[%s7 + $0x40] sm:$0xf]
  %v755 = vld [vmem:[%s7 + $0x44] sm:$0xf]
  %v756 = vld [vmem:[%s7 + $0x48] sm:$0xf]
  %v757 = vld [vmem:[%s7 + $0x4c] sm:$0xf]
  %v758 = vld [vmem:[%s7 + $0x50] sm:$0xf]
  %v759 = vld [vmem:[%s7 + $0x54] sm:$0xf]
  %v760 = vld [vmem:[%s7 + $0x58] sm:$0xf]
  %v761 = vld [vmem:[%s7 + $0x5c] sm:$0xf]
  %v762 = vld [vmem:[%s7 + $0x60] sm:$0xf]
  %v763 = vld [vmem:[%s7 + $0x64] sm:$0xf]
  %v764 = vld [vmem:[%s7 + $0x68] sm:$0xf]
  %v765 = vld [vmem:[%s7 + $0x6c] sm:$0xf]
  %v766 = vld [vmem:[%s7 + $0x70] sm:$0xf]
  %v767 = vld [vmem:[%s7 + $0x74] sm:$0xf]
  %v768 = vld [vmem:[%s7 + $0x78] sm:$0xf]
  %v769 = vld [vmem:[%s7 + $0x7c] sm:$0xf]
  %v770 = vld [vmem:[%s8] sm:$0x1]
  %v772 = vperm.slane %v770, 0
  %v806 = vunpack.c.l.b16 %v738
  %v807 = vunpack.c.l.b16 %v739
  %v808 = vunpack.c.l.b16 %v740
  %v809 = vunpack.c.l.b16 %v741
  %v810 = vunpack.c.l.b16 %v742
  %v811 = vunpack.c.l.b16 %v743
  %v812 = vunpack.c.l.b16 %v744
  %v813 = vunpack.c.l.b16 %v745
  %v814 = vunpack.c.l.b16 %v746
  %v815 = vunpack.c.l.b16 %v747
  %v816 = vunpack.c.l.b16 %v748
  %v817 = vunpack.c.l.b16 %v749
  %v818 = vunpack.c.l.b16 %v750
  %v819 = vunpack.c.l.b16 %v751
  %v820 = vunpack.c.l.b16 %v752
  %v821 = vunpack.c.l.b16 %v753
  %v822 = vunpack.c.l.b16 %v754
  %v823 = vunpack.c.l.b16 %v755
  %v824 = vunpack.c.l.b16 %v756
  %v825 = vunpack.c.l.b16 %v757
  %v826 = vunpack.c.l.b16 %v758
  %v827 = vunpack.c.l.b16 %v759
  %v828 = vunpack.c.l.b16 %v760
  %v829 = vunpack.c.l.b16 %v761
  %v830 = vunpack.c.l.b16 %v762
  %v831 = vunpack.c.l.b16 %v763
  %v832 = vunpack.c.l.b16 %v764
  %v833 = vunpack.c.l.b16 %v765
  %v834 = vunpack.c.l.b16 %v766
  %v835 = vunpack.c.l.b16 %v767
  %v836 = vunpack.c.l.b16 %v768
  %v837 = vunpack.c.l.b16 %v769
  %v838 = vpack.c.b16 %v807, %v806
  %v839 = vpack.c.b16 %v809, %v808
  %v840 = vpack.c.b16 %v811, %v810
  %v841 = vpack.c.b16 %v813, %v812
  %v842 = vpack.c.b16 %v815, %v814
  %v843 = vpack.c.b16 %v817, %v816
  %v844 = vpack.c.b16 %v819, %v818
  %v845 = vpack.c.b16 %v821, %v820
  %v846 = vpack.c.b16 %v823, %v822
  %v847 = vpack.c.b16 %v825, %v824
  %v848 = vpack.c.b16 %v827, %v826
  %v849 = vpack.c.b16 %v829, %v828
  %v850 = vpack.c.b16 %v831, %v830
  %v851 = vpack.c.b16 %v833, %v832
  %v852 = vpack.c.b16 %v835, %v834
  %v853 = vpack.c.b16 %v837, %v836
  %870 = vmatpush.bf16.msra.mxu0 %v845
  %871 = vmatpush.bf16.msra.mxu0 %v844
  %872 = vmatpush.bf16.msra.mxu0 %v843
  %873 = vmatpush.bf16.msra.mxu0 %v842
  %874 = vmatpush.bf16.msra.mxu0 %v841
  %875 = vmatpush.bf16.msra.mxu0 %v840
  %876 = vmatpush.bf16.msra.mxu0 %v839
  %877 = vmatpush.bf16.msra.mxu0 %v838
  %878 = vmatmul.bf16.gmra.mxu0 %v722
  %v879 = vpop.f32.mrf.mxu0
  %v880 = vadd.f32 %v772, %v879
  %v881 = vpop.f32.mrf.mxu0
  %v882 = vadd.f32 %v772, %v881
  %883 = vmatmul.bf16.gmra.mxu0 %v724
  %v884 = vpop.f32.mrf.mxu0
  %v885 = vadd.f32 %v772, %v884
  %v886 = vpop.f32.mrf.mxu0
  %v887 = vadd.f32 %v772, %v886
  %888 = vmatmul.bf16.gmra.mxu0 %v726
  %v889 = vpop.f32.mrf.mxu0
  %v890 = vadd.f32 %v772, %v889
  %v891 = vpop.f32.mrf.mxu0
  %v892 = vadd.f32 %v772, %v891
  %893 = vmatmul.bf16.gmra.mxu0 %v728
  %v894 = vpop.f32.mrf.mxu0
  %v895 = vadd.f32 %v772, %v894
  %v896 = vpop.f32.mrf.mxu0
  %v897 = vadd.f32 %v772, %v896
  %898 = vmatmul.bf16.gmra.mxu0 %v730
  %v899 = vpop.f32.mrf.mxu0
  %v900 = vadd.f32 %v772, %v899
  %v901 = vpop.f32.mrf.mxu0
  %v902 = vadd.f32 %v772, %v901
  %903 = vmatmul.bf16.gmra.mxu0 %v732
  %v904 = vpop.f32.mrf.mxu0
  %v905 = vadd.f32 %v772, %v904
  %v906 = vpop.f32.mrf.mxu0
  %v907 = vadd.f32 %v772, %v906
  %908 = vmatmul.bf16.gmra.mxu0 %v734
  %v909 = vpop.f32.mrf.mxu0
  %v910 = vadd.f32 %v772, %v909
  %v911 = vpop.f32.mrf.mxu0
  %v912 = vadd.f32 %v772, %v911
  %913 = vmatmul.bf16.gmra.mxu0 %v736
  %v914 = vpop.f32.mrf.mxu0
  %v915 = vadd.f32 %v772, %v914
  %v916 = vpop.f32.mrf.mxu0
  %v917 = vadd.f32 %v772, %v916
  %918 = vdwg.mxu0
  %919 = vmatpush.bf16.msra.mxu0 %v853
  %920 = vmatpush.bf16.msra.mxu0 %v852
  %921 = vmatpush.bf16.msra.mxu0 %v851
  %922 = vmatpush.bf16.msra.mxu0 %v850
  %923 = vmatpush.bf16.msra.mxu0 %v849
  %924 = vmatpush.bf16.msra.mxu0 %v848
  %925 = vmatpush.bf16.msra.mxu0 %v847
  %926 = vmatpush.bf16.msra.mxu0 %v846
  %927 = vmatmul.bf16.gmra.mxu0 %v723
  %v928 = vpop.f32.mrf.mxu0
  %v929 = vadd.f32 %v880, %v928
  %v930 = vpop.f32.mrf.mxu0
  %v931 = vadd.f32 %v882, %v930
  %932 = vmatmul.bf16.gmra.mxu0 %v725
  %v933 = vpop.f32.mrf.mxu0
  %v934 = vadd.f32 %v885, %v933
  %v935 = vpop.f32.mrf.mxu0
  %v936 = vadd.f32 %v887, %v935
  %937 = vmatmul.bf16.gmra.mxu0 %v727
  %v938 = vpop.f32.mrf.mxu0
  %v939 = vadd.f32 %v890, %v938
  %v940 = vpop.f32.mrf.mxu0
  %v941 = vadd.f32 %v892, %v940
  %942 = vmatmul.bf16.gmra.mxu0 %v729
  %v943 = vpop.f32.mrf.mxu0
  %v944 = vadd.f32 %v895, %v943
  %v945 = vpop.f32.mrf.mxu0
  %v946 = vadd.f32 %v897, %v945
  %947 = vmatmul.bf16.gmra.mxu0 %v731
  %v948 = vpop.f32.mrf.mxu0
  %v949 = vadd.f32 %v900, %v948
  %v950 = vpop.f32.mrf.mxu0
  %v951 = vadd.f32 %v902, %v950
  %952 = vmatmul.bf16.gmra.mxu0 %v733
  %v953 = vpop.f32.mrf.mxu0
  %v954 = vadd.f32 %v905, %v953
  %v955 = vpop.f32.mrf.mxu0
  %v956 = vadd.f32 %v907, %v955
  %957 = vmatmul.bf16.gmra.mxu0 %v735
  %v958 = vpop.f32.mrf.mxu0
  %v959 = vadd.f32 %v910, %v958
  %v960 = vpop.f32.mrf.mxu0
  %v961 = vadd.f32 %v912, %v960
  %962 = vmatmul.bf16.gmra.mxu0 %v737
  %v963 = vpop.f32.mrf.mxu0
  %v964 = vadd.f32 %v915, %v963
  %v965 = vpop.f32.mrf.mxu0
  %v966 = vadd.f32 %v917, %v965
  %967 = vdwg.mxu0
  %vm968 = vcmp.ge.f32.partialorder %v929, 0.0
  %vm969 = vcmp.ge.f32.partialorder %v931, 0.0
  %vm970 = vcmp.ge.f32.partialorder %v934, 0.0
  %vm971 = vcmp.ge.f32.partialorder %v936, 0.0
  %vm972 = vcmp.ge.f32.partialorder %v939, 0.0
  %vm973 = vcmp.ge.f32.partialorder %v941, 0.0
  %vm974 = vcmp.ge.f32.partialorder %v944, 0.0
  %vm975 = vcmp.ge.f32.partialorder %v946, 0.0
  %vm976 = vcmp.ge.f32.partialorder %v949, 0.0
  %vm977 = vcmp.ge.f32.partialorder %v951, 0.0
  %vm978 = vcmp.ge.f32.partialorder %v954, 0.0
  %vm979 = vcmp.ge.f32.partialorder %v956, 0.0
  %vm980 = vcmp.ge.f32.partialorder %v959, 0.0
  %vm981 = vcmp.ge.f32.partialorder %v961, 0.0
  %vm982 = vcmp.ge.f32.partialorder %v964, 0.0
  %vm983 = vcmp.ge.f32.partialorder %v966, 0.0
  %v984 = vmul.f32 %v929, 0.01
  %v985 = vmul.f32 %v931, 0.01
  %v986 = vmul.f32 %v934, 0.01
  %v987 = vmul.f32 %v936, 0.01
  %v988 = vmul.f32 %v939, 0.01
  %v989 = vmul.f32 %v941, 0.01
  %v990 = vmul.f32 %v944, 0.01
  %v991 = vmul.f32 %v946, 0.01
  %v992 = vmul.f32 %v949, 0.01
  %v993 = vmul.f32 %v951, 0.01
  %v994 = vmul.f32 %v954, 0.01
  %v995 = vmul.f32 %v956, 0.01
  %v996 = vmul.f32 %v959, 0.01
  %v997 = vmul.f32 %v961, 0.01
  %v998 = vmul.f32 %v964, 0.01
  %v999 = vmul.f32 %v966, 0.01
  %v1000 = vsel %vm968, %v929, %v984
  %v1001 = vsel %vm969, %v931, %v985
  %v1002 = vsel %vm970, %v934, %v986
  %v1003 = vsel %vm971, %v936, %v987
  %v1004 = vsel %vm972, %v939, %v988
  %v1005 = vsel %vm973, %v941, %v989
  %v1006 = vsel %vm974, %v944, %v990
  %v1007 = vsel %vm975, %v946, %v991
  %v1008 = vsel %vm976, %v949, %v992
  %v1009 = vsel %vm977, %v951, %v993
  %v1010 = vsel %vm978, %v954, %v994
  %v1011 = vsel %vm979, %v956, %v995
  %v1012 = vsel %vm980, %v959, %v996
  %v1013 = vsel %vm981, %v961, %v997
  %v1014 = vsel %vm982, %v964, %v998
  %v1015 = vsel %vm983, %v966, %v999
  %v1016 = vpack.c.bf16 %v1001, %v1000
  %v1017 = vpack.c.bf16 %v1003, %v1002
  %v1018 = vpack.c.bf16 %v1005, %v1004
  %v1019 = vpack.c.bf16 %v1007, %v1006
  %v1020 = vpack.c.bf16 %v1009, %v1008
  %v1021 = vpack.c.bf16 %v1011, %v1010
  %v1022 = vpack.c.bf16 %v1013, %v1012
  %v1023 = vpack.c.bf16 %v1015, %v1014
  %v1024 = vld [vmem:[%s9] sm:$0xf]
  %v1025 = vld [vmem:[%s9 + $0x4] sm:$0xf]
  %v1026 = vld [vmem:[%s9 + $0x8] sm:$0xf]
  %v1027 = vld [vmem:[%s9 + $0xc] sm:$0xf]
  %v1028 = vld [vmem:[%s9 + $0x10] sm:$0xf]
  %v1029 = vld [vmem:[%s9 + $0x14] sm:$0xf]
  %v1030 = vld [vmem:[%s9 + $0x18] sm:$0xf]
  %v1031 = vld [vmem:[%s9 + $0x1c] sm:$0xf]
  %v1032 = vld [vmem:[%s9 + $0x20] sm:$0xf]
  %v1033 = vld [vmem:[%s9 + $0x24] sm:$0xf]
  %v1034 = vld [vmem:[%s9 + $0x28] sm:$0xf]
  %v1035 = vld [vmem:[%s9 + $0x2c] sm:$0xf]
  %v1036 = vld [vmem:[%s9 + $0x30] sm:$0xf]
  %v1037 = vld [vmem:[%s9 + $0x34] sm:$0xf]
  %v1038 = vld [vmem:[%s9 + $0x38] sm:$0xf]
  %v1039 = vld [vmem:[%s9 + $0x3c] sm:$0xf]
  %v1040 = vld [vmem:[%s10] sm:$0x1]
  %v1042 = vperm.slane %v1040, 0
  %v1060 = vunpack.c.l.b16 %v1024
  %v1061 = vunpack.c.l.b16 %v1025
  %v1062 = vunpack.c.l.b16 %v1026
  %v1063 = vunpack.c.l.b16 %v1027
  %v1064 = vunpack.c.l.b16 %v1028
  %v1065 = vunpack.c.l.b16 %v1029
  %v1066 = vunpack.c.l.b16 %v1030
  %v1067 = vunpack.c.l.b16 %v1031
  %v1068 = vunpack.c.l.b16 %v1032
  %v1069 = vunpack.c.l.b16 %v1033
  %v1070 = vunpack.c.l.b16 %v1034
  %v1071 = vunpack.c.l.b16 %v1035
  %v1072 = vunpack.c.l.b16 %v1036
  %v1073 = vunpack.c.l.b16 %v1037
  %v1074 = vunpack.c.l.b16 %v1038
  %v1075 = vunpack.c.l.b16 %v1039
  %v1076 = vpack.c.b16 %v1061, %v1060
  %v1077 = vpack.c.b16 %v1063, %v1062
  %v1078 = vpack.c.b16 %v1065, %v1064
  %v1079 = vpack.c.b16 %v1067, %v1066
  %v1080 = vpack.c.b16 %v1069, %v1068
  %v1081 = vpack.c.b16 %v1071, %v1070
  %v1082 = vpack.c.b16 %v1073, %v1072
  %v1083 = vpack.c.b16 %v1075, %v1074
  %1092 = vmatpush.bf16.msra.mxu0 %v1083
  %1093 = vmatpush.bf16.msra.mxu0 %v1082
  %1094 = vmatpush.bf16.msra.mxu0 %v1081
  %1095 = vmatpush.bf16.msra.mxu0 %v1080
  %1096 = vmatpush.bf16.msra.mxu0 %v1079
  %1097 = vmatpush.bf16.msra.mxu0 %v1078
  %1098 = vmatpush.bf16.msra.mxu0 %v1077
  %1099 = vmatpush.bf16.msra.mxu0 %v1076
  %1100 = vmatmul.bf16.gmra.mxu0 %v1016
  %v1101 = vpop.f32.mrf.mxu0
  %v1102 = vadd.f32 %v1042, %v1101
  %v1103 = vpop.f32.mrf.mxu0
  %v1104 = vadd.f32 %v1042, %v1103
  %1105 = vmatmul.bf16.gmra.mxu0 %v1017
  %v1106 = vpop.f32.mrf.mxu0
  %v1107 = vadd.f32 %v1042, %v1106
  %v1108 = vpop.f32.mrf.mxu0
  %v1109 = vadd.f32 %v1042, %v1108
  %1110 = vmatmul.bf16.gmra.mxu0 %v1018
  %v1111 = vpop.f32.mrf.mxu0
  %v1112 = vadd.f32 %v1042, %v1111
  %v1113 = vpop.f32.mrf.mxu0
  %v1114 = vadd.f32 %v1042, %v1113
  %1115 = vmatmul.bf16.gmra.mxu0 %v1019
  %v1116 = vpop.f32.mrf.mxu0
  %v1117 = vadd.f32 %v1042, %v1116
  %v1118 = vpop.f32.mrf.mxu0
  %v1119 = vadd.f32 %v1042, %v1118
  %1120 = vmatmul.bf16.gmra.mxu0 %v1020
  %v1121 = vpop.f32.mrf.mxu0
  %v1122 = vadd.f32 %v1042, %v1121
  %v1123 = vpop.f32.mrf.mxu0
  %v1124 = vadd.f32 %v1042, %v1123
  %1125 = vmatmul.bf16.gmra.mxu0 %v1021
  %v1126 = vpop.f32.mrf.mxu0
  %v1127 = vadd.f32 %v1042, %v1126
  %v1128 = vpop.f32.mrf.mxu0
  %v1129 = vadd.f32 %v1042, %v1128
  %1130 = vmatmul.bf16.gmra.mxu0 %v1022
  %v1131 = vpop.f32.mrf.mxu0
  %v1132 = vadd.f32 %v1042, %v1131
  %v1133 = vpop.f32.mrf.mxu0
  %v1134 = vadd.f32 %v1042, %v1133
  %1135 = vmatmul.bf16.gmra.mxu0 %v1023
  %v1136 = vpop.f32.mrf.mxu0
  %v1137 = vadd.f32 %v1042, %v1136
  %v1138 = vpop.f32.mrf.mxu0
  %v1139 = vadd.f32 %v1042, %v1138
  %1140 = vdwg.mxu0
  %vm1141 = vcmp.ge.f32.partialorder %v1102, 0.0
  %vm1142 = vcmp.ge.f32.partialorder %v1104, 0.0
  %vm1143 = vcmp.ge.f32.partialorder %v1107, 0.0
  %vm1144 = vcmp.ge.f32.partialorder %v1109, 0.0
  %vm1145 = vcmp.ge.f32.partialorder %v1112, 0.0
  %vm1146 = vcmp.ge.f32.partialorder %v1114, 0.0
  %vm1147 = vcmp.ge.f32.partialorder %v1117, 0.0
  %vm1148 = vcmp.ge.f32.partialorder %v1119, 0.0
  %vm1149 = vcmp.ge.f32.partialorder %v1122, 0.0
  %vm1150 = vcmp.ge.f32.partialorder %v1124, 0.0
  %vm1151 = vcmp.ge.f32.partialorder %v1127, 0.0
  %vm1152 = vcmp.ge.f32.partialorder %v1129, 0.0
  %vm1153 = vcmp.ge.f32.partialorder %v1132, 0.0
  %vm1154 = vcmp.ge.f32.partialorder %v1134, 0.0
  %vm1155 = vcmp.ge.f32.partialorder %v1137, 0.0
  %vm1156 = vcmp.ge.f32.partialorder %v1139, 0.0
  %v1157 = vmul.f32 %v1102, 0.01
  %v1158 = vmul.f32 %v1104, 0.01
  %v1159 = vmul.f32 %v1107, 0.01
  %v1160 = vmul.f32 %v1109, 0.01
  %v1161 = vmul.f32 %v1112, 0.01
  %v1162 = vmul.f32 %v1114, 0.01
  %v1163 = vmul.f32 %v1117, 0.01
  %v1164 = vmul.f32 %v1119, 0.01
  %v1165 = vmul.f32 %v1122, 0.01
  %v1166 = vmul.f32 %v1124, 0.01
  %v1167 = vmul.f32 %v1127, 0.01
  %v1168 = vmul.f32 %v1129, 0.01
  %v1169 = vmul.f32 %v1132, 0.01
  %v1170 = vmul.f32 %v1134, 0.01
  %v1171 = vmul.f32 %v1137, 0.01
  %v1172 = vmul.f32 %v1139, 0.01
  %v1173 = vsel %vm1141, %v1102, %v1157
  %v1174 = vsel %vm1142, %v1104, %v1158
  %v1175 = vsel %vm1143, %v1107, %v1159
  %v1176 = vsel %vm1144, %v1109, %v1160
  %v1177 = vsel %vm1145, %v1112, %v1161
  %v1178 = vsel %vm1146, %v1114, %v1162
  %v1179 = vsel %vm1147, %v1117, %v1163
  %v1180 = vsel %vm1148, %v1119, %v1164
  %v1181 = vsel %vm1149, %v1122, %v1165
  %v1182 = vsel %vm1150, %v1124, %v1166
  %v1183 = vsel %vm1151, %v1127, %v1167
  %v1184 = vsel %vm1152, %v1129, %v1168
  %v1185 = vsel %vm1153, %v1132, %v1169
  %v1186 = vsel %vm1154, %v1134, %v1170
  %v1187 = vsel %vm1155, %v1137, %v1171
  %v1188 = vsel %vm1156, %v1139, %v1172
  %v1189 = vld [vmem:[%s11] sm:$0x1]
  %v1190 = vld [vmem:[#allocation2] sm:$0x1]
  %1192 = vset.pattern.permute.xlu0 0
  %1193 = vperm.xlu0 %1192, %v1190
  %v1194 = vpop.permute.xlu0 %1193
  %v1196 = vperm.slane %v1194, 0
  %1197 = vmatpush.xpose.msra.mxu0 %v1188
  %1198 = vmatpush.xpose.msra.mxu0 %v1187
  %1199 = vmatpush.xpose.msra.mxu0 %v1186
  %1200 = vmatpush.xpose.msra.mxu0 %v1185
  %1201 = vmatpush.xpose.msra.mxu0 %v1184
  %1202 = vmatpush.xpose.msra.mxu0 %v1183
  %1203 = vmatpush.xpose.msra.mxu0 %v1182
  %1204 = vmatpush.xpose.msra.mxu0 %v1181
  %1205 = vmatpush.xpose.msra.mxu0 %v1180
  %1206 = vmatpush.xpose.msra.mxu0 %v1179
  %1207 = vmatpush.xpose.msra.mxu0 %v1178
  %1208 = vmatpush.xpose.msra.mxu0 %v1177
  %1209 = vmatpush.xpose.msra.mxu0 %v1176
  %1210 = vmatpush.xpose.msra.mxu0 %v1175
  %1211 = vmatpush.xpose.msra.mxu0 %v1174
  %1212 = vmatpush.xpose.msra.mxu0 %v1173
  %1213 = vmatmul.f32.gmra.mxu0 %v1189
  %v1214 = vpop.f32.mrf.mxu0
  %v1215 = vadd.f32 %v1196, %v1214
  %1216 = vdwg.mxu0
  %v1217 = vxor.u32 %v1215, 2147483648
  %v1218 = vmul.f32 %v1217, 1.442695
  %v1219 = vpow.pop %v1218
  %v1220 = vadd.f32 %v1219, 1.0
  %v1221 = vrcp.pop %v1220
  %v1222 = vmul.f32 %v1220, %v1221
  %v1223 = vsub.f32 1.0, %v1222
  %v1224 = vmul.f32 %v1221, %v1223
  %v1225 = vadd.f32 %v1221, %v1224
  %vm1226 = vweird.f32 %v1220
  %vm1227 = vweird.f32 %v1221
  %vm1228 = vmor %vm1226, %vm1227
  %v1229 = vsel %vm1228, %v1221, %v1225
  %v1230 = vand.u32 2147483647, %v1220
  %vm1231 = vcmp.eq.f32.partialorder %v1230, 8.507059e+37
  %v1232 = vand.u32 %v1220, 2147483648
  %v1233 = vor.u32 1.1754944e-38, %v1232
  %v1234 = vsel %vm1231, %v1233, %v1229
  %v1235 = vmul.f32 1.0, %v1234
  %1236 = vst [vmem:[%s13] sm:$0x1] %v1235
  // Predicated region
  $region54: #{classify1_forward.1} parent=0 // pred_check
    _
  $region55: #{classify1_forward.1} parent=0 // pred_check_branch
    %1238 = sbr.rel (0) target = $region57
  $region56: #{classify1_forward.1} parent=0 // pred_region
    _
  $region57: #{classify1_forward.1} parent=0 // pred_fallthru
    _
  // Predicated region
  $region58: #{classify1_forward.1} parent=0 // pred_check
    _
  $region59: #{classify1_forward.1} parent=0 // pred_check_branch
    %1240 = sbr.rel (0) target = $region61
  $region60: #{classify1_forward.1} parent=0 // pred_region
    _
  $region61: #{classify1_forward.1} parent=0 // pred_fallthru
    _

</llo_original>
